<compile_context>
chip_gen: v7x
topology: tpu7x:2x2x1
jax: 0.10.0
libtpu: 0.0.40
codegen_flags: <defaults>
</compile_context>

<pallas_src>
import functools
import math

import jax
import jax.numpy as jnp
from jax.experimental import pallas as pl
from jax.experimental.pallas import tpu as pltpu


def _round_up(x: int, m: int) -> int:
    return ((x + m - 1) // m) * m


def _pick_tile(dim: int, max_tile: int, unit: int = 128, max_waste: float = 0.10) -> int:
    """Largest tile (multiple of `unit`, <= max_tile) whose zero-padding waste is <= max_waste.

    `dim` is assumed to already be a multiple of `unit`.
    """
    if dim <= max_tile:
        return dim
    best = unit
    t = unit
    while t <= max_tile:
        pad = _round_up(dim, t)
        if (pad - dim) / dim <= max_waste:
            best = t
        t += unit
    return best


def _make_linear_kernel(has_bias: bool, multi_k: bool, acc_in_out: bool):
    def kernel(*refs):
        if has_bias:
            x_ref, w_ref, b_ref, o_ref, *rest = refs
        else:
            x_ref, w_ref, o_ref, *rest = refs
            b_ref = None

        if not multi_k:
            # Single reduction block: no accumulator state, no pl.when.
            acc = jnp.dot(x_ref[...], w_ref[...], preferred_element_type=jnp.float32)
            if has_bias:
                acc = acc + b_ref[...]          # bias is f32, added at full precision
            o_ref[...] = acc.astype(o_ref.dtype)
            return

        acc_ref = o_ref if acc_in_out else rest[0]
        k = pl.program_id(2)

        @pl.when(k == 0)
        def _init():
            acc_ref[...] = jnp.zeros_like(acc_ref)

        acc_ref[...] += jnp.dot(
            x_ref[...], w_ref[...], preferred_element_type=jnp.float32
        )

        if has_bias or not acc_in_out:
            @pl.when(k == pl.num_programs(2) - 1)
            def _finalize():
                acc = acc_ref[...]
                if has_bias:
                    acc = acc + b_ref[...]
                o_ref[...] = acc.astype(o_ref.dtype)

    return kernel


@functools.partial(jax.jit, static_argnames=("tm", "tn", "tk", "out_dtype"))
def _pallas_linear(x2d, w_t, bias2d, *, tm, tn, tk, out_dtype):
    """x2d: (M_pad, K_pad), w_t: (K_pad, N_pad), bias2d: (1, N_pad) f32 or None -> (M_pad, N_pad)."""
    M, K = x2d.shape
    Kw, N = w_t.shape
    assert K == Kw and M % tm == 0 and N % tn == 0 and K % tk == 0

    has_bias = bias2d is not None
    out_dtype = jnp.dtype(out_dtype)
    grid_m, grid_n, grid_k = M // tm, N // tn, K // tk
    multi_k = grid_k > 1
    acc_in_out = multi_k and out_dtype == jnp.dtype(jnp.float32)

    if multi_k:
        grid = (grid_m, grid_n, grid_k)                      # reduction axis last
        in_specs = [
            pl.BlockSpec((tm, tk), lambda i, j, k: (i, k)),  # activation tile
            pl.BlockSpec((tk, tn), lambda i, j, k: (k, j)),  # K-major weight tile
        ]
        bias_spec = pl.BlockSpec((1, tn), lambda i, j, k: (0, j))
        out_spec = pl.BlockSpec((tm, tn), lambda i, j, k: (i, j))
        dims = ("parallel", "parallel", "arbitrary")
        scratch = [] if acc_in_out else [pltpu.VMEM((tm, tn), jnp.float32)]
    else:
        grid = (grid_m, grid_n)
        in_specs = [
            pl.BlockSpec((tm, tk), lambda i, j: (i, 0)),
            pl.BlockSpec((tk, tn), lambda i, j: (0, j)),
        ]
        bias_spec = pl.BlockSpec((1, tn), lambda i, j: (0, j))
        out_spec = pl.BlockSpec((tm, tn), lambda i, j: (i, j))
        dims = ("parallel", "parallel")
        scratch = []

    args = [x2d, w_t]
    if has_bias:
        in_specs.append(bias_spec)
        args.append(bias2d)

    in_item = jnp.dtype(x2d.dtype).itemsize
    w_item = jnp.dtype(w_t.dtype).itemsize
    out_item = out_dtype.itemsize

    # Double-buffered input tiles + double-buffered output tile (+ bias, + scratch).
    vmem_need = (
        2 * (tm * tk * in_item + tk * tn * w_item)
        + 2 * tm * tn * out_item
        + (2 * tn * 4 if has_bias else 0)
        + (tm * tn * 4 if scratch else 0)
    )
    try:
        vmem_cap = int(getattr(pltpu.get_tpu_info(), "vmem_capacity_bytes", 64 << 20))
    except Exception:  # pragma: no cover - conservative fallback (v7x-sized)
        vmem_cap = 64 << 20
    vmem_limit = min(max(2 * vmem_need, 32 << 20), int(0.75 * vmem_cap))
    vmem_limit = max(vmem_limit, vmem_need + (4 << 20))

    flops = 2 * M * N * K
    x_streams = grid_n if multi_k else 1      # x re-read per output-column block
    bytes_accessed = (
        M * K * in_item * x_streams
        + K * N * w_item * grid_m            # weight re-read per output-row block
        + M * N * out_item
        + (N * 4 if has_bias else 0)
    )

    return pl.pallas_call(
        _make_linear_kernel(has_bias, multi_k, acc_in_out),
        out_shape=jax.ShapeDtypeStruct((M, N), out_dtype),
        grid=grid,
        in_specs=in_specs,
        out_specs=out_spec,
        scratch_shapes=scratch,
        compiler_params=pltpu.CompilerParams(
            dimension_semantics=dims,
            vmem_limit_bytes=int(vmem_limit),
        ),
        cost_estimate=pl.CostEstimate(
            flops=flops, transcendentals=0, bytes_accessed=bytes_accessed
        ),
    )(*args)


class ColumnParallelLinear:
    """JAX/Pallas port of chitu.tensor_parallel.ColumnParallelLinear (tp_size == 1)."""

    _TM_MAX = 512      # prefill M tile (halves weight re-streaming vs 256)
    _TN_MAX = 512
    _TK_MAX = 1024
    _SINGLE_K_MAX = 2048   # K_pad at or below this -> single reduction block, 2-D grid

    def __init__(self, in_features, out_features, has_bias=True, gather_output=True,
                 dtype=jnp.float32, bias_dtype=None, compute_dtype=jnp.bfloat16, key=None):
        self.tp_size = 1  # no tp group configured in the reference module by default
        assert out_features % self.tp_size == 0
        self.in_features = in_features
        self.out_features = out_features
        self.gather_output = gather_output

        n_local = out_features // self.tp_size
        self._n_local = n_local
        # bf16 compute by default (f32 accumulation in-kernel). For v7x an fp8 weight
        # path would go here as well.
        # TODO(synk): optional fp8 (float8_e4m3) weight storage for v7x MXU.
        self._compute_dtype = jnp.dtype(compute_dtype)

        key = jax.random.PRNGKey(0) if key is None else key
        kw, kb = jax.random.split(key)
        # Deterministic synthetic init (torch.empty is uninitialized; we use a fixed PRNG).
        self.weight = (jax.random.normal(
            kw, (n_local, in_features), jnp.float32) * 0.02).astype(dtype)
        if has_bias:
            self.bias = (jax.random.normal(
                kb, (n_local,), jnp.float32) * 0.02).astype(bias_dtype or dtype)
        else:
            self.bias = None

        # ---- one-time kernel-friendly layout: (K, N), padded, compute dtype ----
        k128 = _round_up(in_features, 128)
        n128 = _round_up(n_local, 128)

        if k128 <= self._SINGLE_K_MAX:
            self._tk = k128                      # single reduction block -> 2-D grid
        else:
            self._tk = _pick_tile(k128, self._TK_MAX)
        self._k_pad = _round_up(k128, self._tk)

        self._tn = _pick_tile(n128, self._TN_MAX)
        self._n_pad = _round_up(n128, self._tn)

        w_t = jnp.zeros((self._k_pad, self._n_pad), self._compute_dtype)
        w_t = w_t.at[:in_features, :n_local].set(self.weight.T.astype(self._compute_dtype))
        self._w_t = w_t
        if self.bias is not None:
            # Bias stays f32: it is tiny and the epilogue adds it at full precision.
            b2 = jnp.zeros((1, self._n_pad), jnp.float32)
            self._bias2d = b2.at[:, :n_local].set(self.bias.astype(jnp.float32))
        else:
            self._bias2d = None

    def __call__(self, x):
        *lead, K = x.shape
        assert K == self.in_features
        M = math.prod(lead) if lead else 1
        out_dtype = jnp.dtype(x.dtype)

        # Cast activations once to the compute dtype (mixed precision: bf16 inputs,
        # f32 accumulation). Documented numerics difference vs. a pure-f32 reference.
        x2d = x.reshape(M, K).astype(self._compute_dtype)

        # Adaptive M tile: full (rounded) extent for decode-sized M, up to 512 for prefill.
        m_unit = 16 if self._compute_dtype.itemsize == 2 else 8
        if M <= self._TM_MAX:
            tm = max(_round_up(M, m_unit), m_unit)
            m_pad = tm
        else:
            tm = _pick_tile(_round_up(M, 128), self._TM_MAX, unit=128)
            m_pad = _round_up(M, tm)

        if m_pad != M or self._k_pad != K:
            x2d = jnp.pad(x2d, ((0, m_pad - M), (0, self._k_pad - K)))

        # Megacore: keep at least 2 blocks on a parallel axis when both would collapse to 1.
        tn = self._tn
        if (m_pad // tm) == 1 and (self._n_pad // tn) == 1 and tn % 256 == 0:
            tn //= 2

        y2d = _pallas_linear(x2d, self._w_t, self._bias2d,
                             tm=tm, tn=tn, tk=self._tk, out_dtype=out_dtype)
        if m_pad != M or self._n_pad != self._n_local:
            y2d = y2d[:M, :self._n_local]
        y = y2d.reshape(*lead, self._n_local)

        # TODO(synk): gather_output all-gather across a TP mesh axis (tp_size > 1) would use
        # shard_map + jax.lax.all_gather (or a remote-DMA ring kernel); tp_size == 1 here.
        return y


if __name__ == "__main__":
    batch, seq = 2, 8
    in_features, out_features = 128, 256

    key = jax.random.PRNGKey(0)
    kx, kp = jax.random.split(key)
    x = jax.random.normal(kx, (batch, seq, in_features), jnp.float32)

    layer = ColumnParallelLinear(in_features, out_features, has_bias=True,
                                 gather_output=True, key=kp)

    y = jax.block_until_ready(layer(x))

    # Reference matching the kernel's math: bf16 operands, f32 accumulation, f32 bias add
    # (same semantics as torch.nn.functional.linear under bf16 compute).
    x_bf = x.astype(jnp.bfloat16).astype(jnp.float32)
    w_bf = layer.weight.astype(jnp.bfloat16).astype(jnp.float32)
    y_ref = x_bf @ w_bf.T + layer.bias.astype(jnp.float32)

    assert y.shape == (batch, seq, out_features)
    assert y.dtype == x.dtype
    err = float(jnp.max(jnp.abs(y - y_ref)))
    assert jnp.allclose(y, y_ref, atol=1e-4, rtol=1e-4), f"max abs err={err}"

    print("KERNEL_OK")
</pallas_src>

<mosaic_0001>
module attributes {stable_mosaic.version = 11 : i64} {
  func.func @kernel(%arg0: i32, %arg1: i32, %arg2: memref<16x128xbf16, #tpu.memory_space<vmem>>, %arg3: memref<128x128xbf16, #tpu.memory_space<vmem>>, %arg4: memref<1x128xf32, #tpu.memory_space<vmem>>, %arg5: memref<16x128xf32, #tpu.memory_space<vmem>>) attributes {dimension_semantics = [#tpu.dimension_semantics<parallel>, #tpu.dimension_semantics<parallel>], iteration_bounds = array<i64: 1, 2>, scalar_prefetch = 0 : i64, scratch_operands = 0 : i64, tpu.core_type = #tpu.core_type<tc>, window_params = [{transform_indices = @transform_0, window_bounds = array<i64: 16, 128>}, {transform_indices = @transform_1, window_bounds = array<i64: 128, 128>}, {transform_indices = @transform_2, window_bounds = array<i64: 1, 128>}, {transform_indices = @transform_3, window_bounds = array<i64: 16, 128>}]} {
    %c0 = arith.constant 0 : index
    %c0_0 = arith.constant 0 : index
    %0 = vector.load %arg2[%c0, %c0_0] : memref<16x128xbf16, #tpu.memory_space<vmem>>, vector<16x128xbf16>
    %c0_1 = arith.constant 0 : index
    %c0_2 = arith.constant 0 : index
    %1 = vector.load %arg3[%c0_1, %c0_2] : memref<128x128xbf16, #tpu.memory_space<vmem>>, vector<128x128xbf16>
    %cst = arith.constant dense<0.000000e+00> : vector<16x128xf32>
    %2 = tpu.matmul %0, %1, %cst {dimension_numbers = #tpu.dot_dimension_numbers<[1], [0], [0], [1], [0, 0, 1, 1], [], []>} : vector<16x128xbf16>, vector<128x128xbf16>, vector<16x128xf32> -> vector<16x128xf32>
    %c0_3 = arith.constant 0 : index
    %c0_4 = arith.constant 0 : index
    %3 = vector.load %arg4[%c0_3, %c0_4] : memref<1x128xf32, #tpu.memory_space<vmem>>, vector<1x128xf32>
    %4 = vector.broadcast %3 : vector<1x128xf32> to vector<16x128xf32>
    %5 = arith.addf %2, %4 : vector<16x128xf32>
    %c0_5 = arith.constant 0 : index
    %c0_6 = arith.constant 0 : index
    %6 = vector.load %arg5[%c0_5, %c0_6] : memref<16x128xf32, #tpu.memory_space<vmem>>, vector<16x128xf32>
    tpu.vector_store %arg5[%c0_5, %c0_6], %5 {strides = array<i32>} : memref<16x128xf32, #tpu.memory_space<vmem>>, vector<16x128xf32>,
    return
  }
  func.func @transform_0(%arg0: i32, %arg1: i32) -> (i32, i32) {
    %c0_i32 = arith.constant 0 : i32
    %c0_i32_0 = arith.constant 0 : i32
    return %arg0, %c0_i32 : i32, i32
  }
  func.func @transform_1(%arg0: i32, %arg1: i32) -> (i32, i32) {
    %c0_i32 = arith.constant 0 : i32
    %c0_i32_0 = arith.constant 0 : i32
    return %c0_i32, %arg1 : i32, i32
  }
  func.func @transform_2(%arg0: i32, %arg1: i32) -> (i32, i32) {
    %c0_i32 = arith.constant 0 : i32
    %c0_i32_0 = arith.constant 0 : i32
    return %c0_i32, %arg1 : i32, i32
  }
  func.func @transform_3(%arg0: i32, %arg1: i32) -> (i32, i32) {
    %c0_i32 = arith.constant 0 : i32
    return %arg0, %arg1 : i32, i32
  }
}

</mosaic_0001>

<llo_original>
// kernel: _pallas_linear.1
$region0: #{_pallas_linear.1}
  #allocation0 [shape = 'u32[]', space=smem, size = 0x4, offset = 0x4, fixed_abs, tag = 'smem constant byte address 0x4 - core index']
  #allocation1 [shape = 'u32[144,128]{1,0:T(1,128)}', space=vmem, size = 0x12000, scoped, tag = 'internal scratch']
  %s0 = inlined_call_operand.hbm [shape: bf16[16,128], index: 0, kind: input, shape index: {}]
  %s1 = inlined_call_operand.hbm [shape: bf16[128,256], index: 1, kind: input, shape index: {}]
  %s2 = inlined_call_operand.vmem [shape: f32[1,256], index: 2, kind: input, shape index: {}]
  %s3 = inlined_call_operand.hbm [shape: f32[16,256], index: 3, kind: output, shape index: {}]
  %s4 = sld [smem:[#allocation0]]
  $region53: #{_pallas_linear.1} parent=0
    _
  %s6 = ssub.s32 1, %s4
  %s7 = scalar_select 0, %s6, %s4
  $region1: #{_pallas_linear.1} parent=0
    #allocation2 [shape = 'u8[4096]{0}', space=vmem, size = 0x1000, scoped, tag = 'input window, operand 0, single buffered']
    #allocation3 [shape = 's32[2]{0}', space=sflag, size = 0x8, scoped, tag = 'scoped memory for _pallas_linear.1']
    #allocation4 [shape = 's32[2]{0}', space=sflag, size = 0x8, scoped, tag = 'scoped memory for _pallas_linear.1']
    #allocation5 [shape = 'u8[65536]{0}', space=vmem, size = 0x10000, scoped, tag = 'input window, operand 1']
    #allocation6 [shape = 's32[2]{0}', space=sflag, size = 0x8, scoped, tag = 'scoped memory for _pallas_linear.1']
    #allocation7 [shape = 'u8[16384]{0}', space=vmem, size = 0x4000, scoped, tag = 'output window, operand 0']
    %8 = vsyncpa [#allocation3], 0
    %9 = vsyncpa [#allocation6], 0
    %s10 = scalar_lea.sflag [#allocation6], 1
    %11 = vsyncpa %s10, 0
    %12 = vsyncpa [#allocation4], 0
    %s13 = scalar_lea.sflag [#allocation4], 1
    %14 = vsyncpa %s13, 0
    loop: start=0, step=1, limit=4
    $region2: #{_pallas_linear.1} parent=1 // loop_pre_header
      _
    $region3: #{_pallas_linear.1} parent=1 // loop_header
      %s16 = sphi 0, %s20
      %p17 = scmp.ge.s32.totalorder %s16, 4
      %s23 = sphi 0, %s35
      %s24 = sphi 0, %s31
      %s25 = sphi 0, %s23
      %s26 = sphi 0, %s24
      %s27 = sphi 0, %s25
      %s28 = sphi 0, %s26
      %s38 = sphi 0, %s40
      %s41 = sphi 0, %s38
      %s42 = sphi 0, %s41
      %s58 = sphi 0, %s42
      %s64 = sphi 0, %s66
      %s67 = sphi 0, %s64
      %s68 = sphi 0, %s67
      %s84 = sphi 0, %s68
      %s90 = sphi 0, %s92
      %s93 = sphi 0, %s90
      %s94 = sphi 0, %s93
      %s110 = sphi 0, %s94
      %s118 = sphi 0, %s120
      %s121 = sphi 0, %s118
      %s122 = sphi 0, %s121
      %s138 = sphi 0, %s122
    $region4: #{_pallas_linear.1} parent=1 // loop_header_branch
      %19 = sbr.rel (%p17) target = $region8
    $region5: #{_pallas_linear.1} parent=1 // loop_body
      %s21 = ssub.s32 %s16, 1
      %s22 = ssub.s32 %s16, 2
      %s29 = sadd.s32 1, %s24
      %p30 = scmp.ge.s32.totalorder %s29, 2
      %s31 = scalar_select %p30, 0, %s29
      %s32 = sadd.s32 1, %s23
      %s33 = scalar_select %p30, %s32, %s23
      %p34 = scmp.ge.s32.totalorder %s33, 1
      %s35 = scalar_select %p34, 0, %s33
      %s36 = ssub.s32 %s23, %s35
      %p37 = scmp.eq.s32.totalorder %s36, 0
      %s39 = sadd.s32 %s38, 1
      %s40 = scalar_select %p37, %s38, %s39
      %p43 = pneg %p37
      %p44 = scmp.eq.s32.totalorder %s16, 1
      %p45 = por %p43, %p44
      %p46 = scmp.ne.s32.totalorder %s38, %s41
      %p47 = scmp.eq.s32.totalorder %s16, 0
      %p48 = por %p46, %p47
      %p49 = scmp.ne.s32.totalorder %s38, %s41
      %p50 = scmp.eq.s32.totalorder %s21, 1
      %p51 = por %p49, %p50
      %p52 = scmp.ne.s32.totalorder %s41, %s42
      %p53 = scmp.eq.s32.totalorder %s21, 0
      %p54 = por %p52, %p53
      %p55 = scmp.ne.s32.totalorder %s41, %s42
      %p56 = scmp.eq.s32.totalorder %s22, 1
      %p57 = por %p55, %p56
      %p59 = scmp.ne.s32.totalorder %s42, %s58
      %p60 = scmp.eq.s32.totalorder %s22, 0
      %p61 = por %p59, %p60
      %s62 = ssub.s32 %s24, %s31
      %p63 = scmp.eq.s32.totalorder %s62, 0
      %s65 = sadd.s32 %s64, 1
      %s66 = scalar_select %p63, %s64, %s65
      %p69 = pneg %p63
      %p70 = scmp.eq.s32.totalorder %s16, 1
      %p71 = por %p69, %p70
      %p72 = scmp.ne.s32.totalorder %s64, %s67
      %p73 = scmp.eq.s32.totalorder %s16, 0
      %p74 = por %p72, %p73
      %p75 = scmp.ne.s32.totalorder %s64, %s67
      %p76 = scmp.eq.s32.totalorder %s21, 1
      %p77 = por %p75, %p76
      %p78 = scmp.ne.s32.totalorder %s67, %s68
      %p79 = scmp.eq.s32.totalorder %s21, 0
      %p80 = por %p78, %p79
      %p81 = scmp.ne.s32.totalorder %s67, %s68
      %p82 = scmp.eq.s32.totalorder %s22, 1
      %p83 = por %p81, %p82
      %p85 = scmp.ne.s32.totalorder %s68, %s84
      %p86 = scmp.eq.s32.totalorder %s22, 0
      %p87 = por %p85, %p86
      %s88 = ssub.s32 %s24, %s31
      %p89 = scmp.eq.s32.totalorder %s88, 0
      %s91 = sadd.s32 %s90, 1
      %s92 = scalar_select %p89, %s90, %s91
      %p95 = pneg %p89
      %p96 = scmp.eq.s32.totalorder %s16, 1
      %p97 = por %p95, %p96
      %p98 = scmp.ne.s32.totalorder %s90, %s93
      %p99 = scmp.eq.s32.totalorder %s16, 0
      %p100 = por %p98, %p99
      %p101 = scmp.ne.s32.totalorder %s90, %s93
      %p102 = scmp.eq.s32.totalorder %s21, 1
      %p103 = por %p101, %p102
      %p104 = scmp.ne.s32.totalorder %s93, %s94
      %p105 = scmp.eq.s32.totalorder %s21, 0
      %p106 = por %p104, %p105
      %p107 = scmp.ne.s32.totalorder %s93, %s94
      %p108 = scmp.eq.s32.totalorder %s22, 1
      %p109 = por %p107, %p108
      %p111 = scmp.ne.s32.totalorder %s94, %s110
      %p112 = scmp.eq.s32.totalorder %s22, 0
      %p113 = por %p111, %p112
      %s114 = ssub.s32 %s23, %s35
      %s115 = ssub.s32 %s24, %s31
      %s116 = sor.u32 %s114, %s115
      %p117 = scmp.eq.s32.totalorder %s116, 0
      %s119 = sadd.s32 %s118, 1
      %s120 = scalar_select %p117, %s118, %s119
      %p123 = pneg %p117
      %p124 = scmp.eq.s32.totalorder %s16, 1
      %p125 = por %p123, %p124
      %p126 = scmp.ne.s32.totalorder %s118, %s121
      %p127 = scmp.eq.s32.totalorder %s16, 0
      %p128 = por %p126, %p127
      %p129 = scmp.ne.s32.totalorder %s118, %s121
      %p130 = scmp.eq.s32.totalorder %s21, 1
      %p131 = por %p129, %p130
      %p132 = scmp.ne.s32.totalorder %s121, %s122
      %p133 = scmp.eq.s32.totalorder %s21, 0
      %p134 = por %p132, %p133
      %p135 = scmp.ne.s32.totalorder %s121, %s122
      %p136 = scmp.eq.s32.totalorder %s22, 1
      %p137 = por %p135, %p136
      %p139 = scmp.ne.s32.totalorder %s122, %s138
      %p140 = scmp.eq.s32.totalorder %s22, 0
      %p141 = por %p139, %p140
      %p142 = scmp.le.s32.totalorder 1, %s16
      %p143 = scmp.lt.s32.totalorder %s16, 3
      %p144 = pnand %p142, %p143
      %p145 = pneg %p144
      // Predicated region
      $region9: #{_pallas_linear.1} parent=5 // pred_check
        _
      $region10: #{_pallas_linear.1} parent=5 // pred_check_branch
        %147 = sbr.rel (%p144) target = $region12
      $region11: #{_pallas_linear.1} parent=5 // pred_region
        %s148 = ssub.s32 %s16, 1
        // Predicated region
        $region13: #{_pallas_linear.1} parent=11 // pred_check
          %p149 = pneg %p54
        $region14: #{_pallas_linear.1} parent=11 // pred_check_branch
          %151 = sbr.rel (%p149) target = $region16
        $region15: #{_pallas_linear.1} parent=11 // pred_region
          %s152 = smul.u32 2, %s25
          %s154 = ssub.s32 128, 128
          %155 = vsyncadd [#allocation3], %s154
          %s156 = smul.addr %s152, 64
          %s157 = scalar_lea.hbm %s0, %s156
          %s158 = sshll.u32 [#allocation2], 4
          %s159 = int_to_ptr.vmem [resolvable:$true] %s158
          %164 = dma.hbm_to_vmem [thread:$0]  %s157, 128, %s159, [#allocation3], 64, 64, 4
        $region16: #{_pallas_linear.1} parent=11 // pred_fallthru
          _
      $region12: #{_pallas_linear.1} parent=5 // pred_fallthru
        _
      %p165 = scmp.lt.s32.totalorder %s16, 2
      // Predicated region
      $region17: #{_pallas_linear.1} parent=5 // pred_check
        %p166 = pneg %p165
      $region18: #{_pallas_linear.1} parent=5 // pred_check_branch
        %168 = sbr.rel (%p166) target = $region20
      $region19: #{_pallas_linear.1} parent=5 // pred_region
        // Predicated region
        $region21: #{_pallas_linear.1} parent=19 // pred_check
          %p169 = pneg %p74
        $region22: #{_pallas_linear.1} parent=19 // pred_check_branch
          %171 = sbr.rel (%p169) target = $region24
        $region23: #{_pallas_linear.1} parent=19 // pred_region
          %s172 = sand.u32 %s64, 1
          %s173 = scalar_lea.sflag [#allocation6], %s172
          %s174 = sand.u32 %s64, 1
          %s175 = smul.addr %s174, 64
          %s176 = scalar_lea.vmem [#allocation5], %s175
          %s178 = ssub.s32 1024, 1024
          %179 = vsyncadd %s173, %s178
          %s180 = smul.addr %s24, 64
          %s181 = scalar_lea.hbm %s1, %s180
          %s182 = sshll.u32 %s176, 4
          %s183 = int_to_ptr.vmem [resolvable:$true] %s182
          %188 = dma.hbm_to_vmem [thread:$0]  %s181, 1024, %s183, %s173, 128, 64, 4
        $region24: #{_pallas_linear.1} parent=19 // pred_fallthru
          _
        // Predicated region
        $region25: #{_pallas_linear.1} parent=19 // pred_check
          %p189 = pneg %p100
        $region26: #{_pallas_linear.1} parent=19 // pred_check_branch
          %191 = sbr.rel (%p189) target = $region28
        $region27: #{_pallas_linear.1} parent=19 // pred_region
          %p192 = scmp.lt.s32.totalorder %s24, 1
          %s193 = scalar_select %p192, %s24, 1
          %s194 = scalar_lea.vmem %s2, %s193
        $region28: #{_pallas_linear.1} parent=19 // pred_fallthru
          _
      $region20: #{_pallas_linear.1} parent=5 // pred_fallthru
        _
      %p195 = scmp.le.s32.totalorder 1, %s16
      %p196 = scmp.lt.s32.totalorder %s16, 3
      %p197 = pnand %p195, %p196
      %p198 = pneg %p197
      // Predicated region
      $region29: #{_pallas_linear.1} parent=5 // pred_check
        _
      $region30: #{_pallas_linear.1} parent=5 // pred_check_branch
        %200 = sbr.rel (%p197) target = $region32
      $region31: #{_pallas_linear.1} parent=5 // pred_region
        %s201 = ssub.s32 %s16, 1
        // Predicated region
        $region33: #{_pallas_linear.1} parent=31 // pred_check
          %p202 = pneg %p54
        $region34: #{_pallas_linear.1} parent=31 // pred_check_branch
          %204 = sbr.rel (%p202) target = $region36
        $region35: #{_pallas_linear.1} parent=31 // pred_region
          %205 = dma.done [#allocation3], 128
        $region36: #{_pallas_linear.1} parent=31 // pred_fallthru
          _
        %s206 = sand.u32 %s67, 1
        %s207 = scalar_lea.sflag [#allocation6], %s206
        %s208 = sand.u32 %s67, 1
        %s209 = smul.addr %s208, 64
        %s210 = scalar_lea.vmem [#allocation5], %s209
        // Predicated region
        $region37: #{_pallas_linear.1} parent=31 // pred_check
          %p211 = pneg %p80
        $region38: #{_pallas_linear.1} parent=31 // pred_check_branch
          %213 = sbr.rel (%p211) target = $region40
        $region39: #{_pallas_linear.1} parent=31 // pred_region
          %214 = dma.done %s207, 1024
        $region40: #{_pallas_linear.1} parent=31 // pred_fallthru
          _
        %p215 = pneg %p54
        %p216 = pneg %p51
        %s217 = sand.u32 %s67, 1
        %s218 = scalar_lea.sflag [#allocation6], %s217
        %s219 = sand.u32 %s67, 1
        %s220 = smul.addr %s219, 64
        %s221 = scalar_lea.vmem [#allocation5], %s220
        %p222 = pneg %p80
        %p223 = pneg %p77
        %p224 = scmp.lt.s32.totalorder %s26, 1
        %s225 = scalar_select %p224, %s26, 1
        %s226 = scalar_lea.vmem %s2, %s225
        %p227 = pneg %p106
        %p228 = pneg %p103
        %p229 = pneg %p134
        %p230 = pneg %p131
        %s231 = sand.u32 %s121, 1
        %s232 = scalar_lea.sflag [#allocation4], %s231
        %s233 = sand.u32 %s121, 1
        %s234 = smul.addr %s233, 16
        %s235 = scalar_lea.vmem [#allocation7], %s234
        %s236 = smul.u32 2, %s25
        %p237 = scmp.lt.s32.totalorder %s26, 1
        %s238 = scalar_select %p237, %s26, 1
        %s239 = scalar_lea.vmem %s2, %s238
        %s240 = smul.u32 2, %s25
        %v242 = vld [vmem:[#allocation2] sm:$0xf]
        %v243 = vld [vmem:[#allocation2 + $0x4] sm:$0xf]
        %v244 = vld [vmem:[%s210] sm:$0xf]
        %v245 = vld [vmem:[%s210 + $0x4] sm:$0xf]
        %v246 = vld [vmem:[%s210 + $0x8] sm:$0xf]
        %v247 = vld [vmem:[%s210 + $0xc] sm:$0xf]
        %v248 = vld [vmem:[%s210 + $0x10] sm:$0xf]
        %v249 = vld [vmem:[%s210 + $0x14] sm:$0xf]
        %v250 = vld [vmem:[%s210 + $0x18] sm:$0xf]
        %v251 = vld [vmem:[%s210 + $0x1c] sm:$0xf]
        %v252 = vld [vmem:[%s210 + $0x20] sm:$0xf]
        %v253 = vld [vmem:[%s210 + $0x24] sm:$0xf]
        %v254 = vld [vmem:[%s210 + $0x28] sm:$0xf]
        %v255 = vld [vmem:[%s210 + $0x2c] sm:$0xf]
        %v256 = vld [vmem:[%s210 + $0x30] sm:$0xf]
        %v257 = vld [vmem:[%s210 + $0x34] sm:$0xf]
        %v258 = vld [vmem:[%s210 + $0x38] sm:$0xf]
        %v259 = vld [vmem:[%s210 + $0x3c] sm:$0xf]
        %v260 = vld [vmem:[%s239] sm:$0x1]
        %v262 = vlaneseq
        %v263 = vshrl.u32 %v262, 7
        %v264 = vsub.s32 0, %v263
        %v265 = vrot.slane %v260, %v264
        %v269 = vunpack.c.l.b16 %v242
        %v270 = vunpack.c.l.b16 %v243
        %v271 = vpack.c.b16 %v270, %v269
        %v289 = vunpack.c.l.b16 %v244
        %v290 = vunpack.c.l.b16 %v245
        %v291 = vunpack.c.l.b16 %v246
        %v292 = vunpack.c.l.b16 %v247
        %v293 = vunpack.c.l.b16 %v248
        %v294 = vunpack.c.l.b16 %v249
        %v295 = vunpack.c.l.b16 %v250
        %v296 = vunpack.c.l.b16 %v251
        %v297 = vunpack.c.l.b16 %v252
        %v298 = vunpack.c.l.b16 %v253
        %v299 = vunpack.c.l.b16 %v254
        %v300 = vunpack.c.l.b16 %v255
        %v301 = vunpack.c.l.b16 %v256
        %v302 = vunpack.c.l.b16 %v257
        %v303 = vunpack.c.l.b16 %v258
        %v304 = vunpack.c.l.b16 %v259
        %v305 = vpack.c.b16 %v290, %v289
        %v306 = vpack.c.b16 %v292, %v291
        %v307 = vpack.c.b16 %v294, %v293
        %v308 = vpack.c.b16 %v296, %v295
        %v309 = vpack.c.b16 %v298, %v297
        %v310 = vpack.c.b16 %v300, %v299
        %v311 = vpack.c.b16 %v302, %v301
        %v312 = vpack.c.b16 %v304, %v303
        %321 = vmatprep.subr.bf16.mxu0 0
        %322 = vmatpush1.bf16.msra.mxu0 %v305
        %323 = vmatprep.subr.bf16.mxu0 0
        %324 = vmatpush1.bf16.msra.mxu0 %v306
        %325 = vmatprep.subr.bf16.mxu0 0
        %326 = vmatpush1.bf16.msra.mxu0 %v307
        %327 = vmatprep.subr.bf16.mxu0 0
        %328 = vmatpush1.bf16.msra.mxu0 %v308
        %329 = vmatprep.subr.bf16.mxu0 0
        %330 = vmatpush1.bf16.msra.mxu0 %v309
        %331 = vmatprep.subr.bf16.mxu0 0
        %332 = vmatpush1.bf16.msra.mxu0 %v310
        %333 = vmatprep.subr.bf16.mxu0 0
        %334 = vmatpush1.bf16.msra.mxu0 %v311
        %335 = vmatprep.subr.bf16.mxu0 0
        %336 = vmatpush1.bf16.msra.mxu0 %v312
        %337 = vmatprep.subr.bf16.mxu0 0
        %338 = vmatpush1.bf16.msra.mxu0 0
        %339 = vmatprep.subr.bf16.mxu0 0
        %340 = vmatpush1.bf16.msra.mxu0 0
        %341 = vmatprep.subr.bf16.mxu0 0
        %342 = vmatpush1.bf16.msra.mxu0 0
        %343 = vmatprep.subr.bf16.mxu0 0
        %344 = vmatpush1.bf16.msra.mxu0 0
        %345 = vmatprep.subr.bf16.mxu0 0
        %346 = vmatpush1.bf16.msra.mxu0 0
        %347 = vmatprep.subr.bf16.mxu0 0
        %348 = vmatpush1.bf16.msra.mxu0 0
        %349 = vmatprep.subr.bf16.mxu0 0
        %350 = vmatpush1.bf16.msra.mxu0 0
        %351 = vmatprep.subr.bf16.mxu0 0
        %352 = vmatpush1.bf16.msra.mxu0 0
        %353 = vmatprep.mubr.bf16.mxu0 0
        %354 = vmatmul.mubr.bf16.gmra.mrb[0].mxu0 %v271
        %v355 = vpop.f32.mrb[0].mxu0
        %v356 = vadd.f32 %v265, %v355
        %v357 = vpop.f32.mrb[0].mxu0
        %v358 = vpop.f32.mrb[0].mxu0
        %v359 = vadd.f32 %v265, %v358
        %v360 = vpop.f32.mrb[0].mxu0
        %361 = vdwg.mxu0
        %362 = vst [vmem:[%s235] sm:$0xff] %v356
        %363 = vst [vmem:[%s235 + $0x8] sm:$0xff] %v359
        %s364 = sand.u32 %s121, 1
        %s365 = scalar_lea.sflag [#allocation4], %s364
        %s366 = sand.u32 %s121, 1
        %s367 = smul.addr %s366, 16
        %s368 = scalar_lea.vmem [#allocation7], %s367
        // Predicated region
        $region41: #{_pallas_linear.1} parent=31 // pred_check
          %p369 = pneg %p131
        $region42: #{_pallas_linear.1} parent=31 // pred_check_branch
          %371 = sbr.rel (%p369) target = $region44
        $region43: #{_pallas_linear.1} parent=31 // pred_region
          %s372 = smul.u32 2, %s25
          %s374 = ssub.s32 256, 256
          %375 = vsyncadd %s365, %s374
          %s376 = smul.addr %s372, 2
          %s377 = sadd.s32 %s26, %s376
          %s378 = smul.addr %s377, 128
          %s379 = scalar_lea.hbm %s3, %s378
          %s380 = sshll.u32 %s368, 4
          %s381 = int_to_ptr.vmem [resolvable:$true] %s380
          %386 = dma.vmem_to_hbm [thread:$0]  %s381, 256, %s379, %s365, 128, 256, 8
        $region44: #{_pallas_linear.1} parent=31 // pred_fallthru
          _
      $region32: #{_pallas_linear.1} parent=5 // pred_fallthru
        _
      %p387 = scmp.le.s32.totalorder 2, %s16
      // Predicated region
      $region45: #{_pallas_linear.1} parent=5 // pred_check
        %p388 = pneg %p387
      $region46: #{_pallas_linear.1} parent=5 // pred_check_branch
        %390 = sbr.rel (%p388) target = $region48
      $region47: #{_pallas_linear.1} parent=5 // pred_region
        %s391 = ssub.s32 %s16, 2
        // Predicated region
        $region49: #{_pallas_linear.1} parent=47 // pred_check
          %p392 = pneg %p137
        $region50: #{_pallas_linear.1} parent=47 // pred_check_branch
          %394 = sbr.rel (%p392) target = $region52
        $region51: #{_pallas_linear.1} parent=47 // pred_region
          %s395 = sand.u32 %s122, 1
          %s396 = scalar_lea.sflag [#allocation4], %s395
          %s397 = sand.u32 %s122, 1
          %s398 = smul.addr %s397, 16
          %s399 = scalar_lea.vmem [#allocation7], %s398
          %400 = dma.done %s396, 256
        $region52: #{_pallas_linear.1} parent=47 // pred_fallthru
          _
      $region48: #{_pallas_linear.1} parent=5 // pred_fallthru
        _
    $region6: #{_pallas_linear.1} parent=1 // loop_footer
      %s20 = sadd.s32 1, %s16
    $region7: #{_pallas_linear.1} parent=1 // loop_footer_branch
      %15 = sbr.rel target = $region3
    $region8: #{_pallas_linear.1} parent=1 // loop_exit
      _
    %401 = vsyncpa [#allocation3], 1
    %s402 = scalar_lea.sflag [#allocation3], 1
    %403 = vsyncpa %s402, 1
    %404 = vsyncpa [#allocation6], 1
    %s405 = scalar_lea.sflag [#allocation6], 1
    %406 = vsyncpa %s405, 1
    %407 = vsyncpa [#allocation4], 1
    %s408 = scalar_lea.sflag [#allocation4], 1
    %409 = vsyncpa %s408, 1

</llo_original>
